<compile_context>
chip_gen: v5e
topology: v5e:2x2
jax: 0.10.0
libtpu: 0.0.40
codegen_flags: <defaults>
</compile_context>

<pallas_src>
import functools
import math

import jax
import jax.numpy as jnp
from jax.experimental import pallas as pl
from jax.experimental.pallas import tpu as pltpu


def _round_up(x, m):
    return -(-x // m) * m


def _maxpool_kernel(x_ref, o_ref, *, kk):
    # x_ref: (kk, S_TILE, C_TILE)   o_ref: (S_TILE, C_TILE)
    # Pairwise (tree) elementwise maximum over the kk window-offset slices.
    vals = [x_ref[i] for i in range(kk)]
    while len(vals) > 1:
        nxt = [jnp.maximum(vals[i], vals[i + 1]) for i in range(0, len(vals) - 1, 2)]
        if len(vals) % 2:
            nxt.append(vals[-1])
        vals = nxt
    o_ref[...] = vals[0]


@functools.partial(jax.jit, static_argnames=("kernel_size", "max_in_block_bytes"))
def maxpool2d_ceil(x, kernel_size=3, max_in_block_bytes=None):
    """MaxPool2d(kernel_size, stride=kernel_size, padding=0, ceil_mode=True) on (N,C,H,W)."""
    k = int(kernel_size)
    s = k                                   # PyTorch default: stride = kernel_size
    if x.dtype == jnp.float64:              # TPU has no native f64
        x = x.astype(jnp.float32)
    assert jnp.issubdtype(x.dtype, jnp.floating), "float dtypes only (-inf padding)"

    n, c, h, w = x.shape
    nc = n * c

    # ceil_mode output sizes (padding=0) + PyTorch's trailing-window drop rule.
    h_out = math.ceil((h - k) / s) + 1
    w_out = math.ceil((w - k) / s) + 1
    if (h_out - 1) * s >= h:
        h_out -= 1
    if (w_out - 1) * s >= w:
        w_out -= 1
    assert h_out >= 1 and w_out >= 1, "input too small for this pooling config"

    h_pad = (h_out - 1) * s + k             # == h_out * k  (stride == kernel)
    w_pad = (w_out - 1) * s + k
    nc_pad = _round_up(nc, 128)             # channels on the lane axis
    kk = k * k
    S = h_out * w_out                       # flattened, sublane-dense spatial axis

    # ---- wrapper layout plumbing: one pad pass + one transpose pass (jit-fused) ----
    xf = jnp.pad(x.reshape(nc, h, w),
                 ((0, nc_pad - nc), (0, h_pad - h), (0, w_pad - w)),
                 constant_values=float("-inf"))
    xf = xf.reshape(nc_pad, h_out, k, w_out, k)
    xf = jnp.transpose(xf, (2, 4, 1, 3, 0))            # (k, k, h_out, w_out, NC_pad)
    xf = xf.reshape(kk, S, nc_pad)                     # (kk, S, NC_pad)

    # ---- tile sizing (VMEM-capacity aware; works for v5e/v6e/v7x) ----
    itemsize = jnp.dtype(x.dtype).itemsize
    sub = 8 if itemsize >= 4 else (16 if itemsize == 2 else 32)   # sublane granule
    try:
        vmem_cap = int(pltpu.get_tpu_info().vmem_capacity_bytes)
    except Exception:
        vmem_cap = 64 * 1024 * 1024          # conservative default (v7x per-TC size)
    # Per-input-block budget; the pipeline double-buffers each block.
    budget = int(max_in_block_bytes) if max_in_block_bytes else vmem_cap // 8

    # Channel tile: largest multiple-of-128 divisor of nc_pad whose minimal
    # (one-sublane-granule) block still fits the budget -> no ragged channel blocks,
    # contiguous lane-dense DMA rows.
    c_units = nc_pad // 128
    max_c_units = max(1, budget // (kk * sub * 128 * itemsize))
    cu = max(d for d in range(1, c_units + 1) if c_units % d == 0 and d <= max_c_units)
    c_tile = cu * 128

    # Spatial tile: full extent if it fits (always layout-legal), else a multiple
    # of the sublane granule.
    max_s = max(sub, (budget // (kk * c_tile * itemsize)) // sub * sub)
    s_tile = S if S <= max_s else max_s

    grid_s = pl.cdiv(S, s_tile)
    grid_c = nc_pad // c_tile

    # v7x has 2 TensorCores: guarantee >= 2 blocks along a "parallel" axis when
    # possible (the extra grid step is negligible on single-TC v5e/v6e).
    if grid_s * grid_c == 1:
        if c_units >= 2:
            cu = max(d for d in range(1, c_units) if c_units % d == 0)
            c_tile = cu * 128
            grid_c = nc_pad // c_tile
        elif S >= 2 * sub:
            s_tile = _round_up(pl.cdiv(S, 2), sub)
            grid_s = pl.cdiv(S, s_tile)

    # VMEM limit = actual double-buffered working set + headroom (never the whole
    # physical VMEM — that would starve compiler scratch on v7x).
    in_block = kk * s_tile * c_tile * itemsize
    out_block = s_tile * c_tile * itemsize
    vmem_limit = int(max(2 * (in_block + out_block) + (4 << 20), 16 << 20))
    vmem_limit = int(min(vmem_limit, vmem_cap // 2))

    out_bytes = S * nc_pad * itemsize
    cost = pl.CostEstimate(flops=(kk - 1) * S * nc_pad,
                           transcendentals=0,
                           bytes_accessed=kk * out_bytes + out_bytes)

    out_flat = pl.pallas_call(
        functools.partial(_maxpool_kernel, kk=kk),
        out_shape=jax.ShapeDtypeStruct((S, nc_pad), x.dtype),
        grid=(grid_s, grid_c),
        in_specs=[pl.BlockSpec((kk, s_tile, c_tile), lambda si, ci: (0, si, ci))],
        out_specs=pl.BlockSpec((s_tile, c_tile), lambda si, ci: (si, ci)),
        compiler_params=pltpu.CompilerParams(
            dimension_semantics=("parallel", "parallel"),
            vmem_limit_bytes=vmem_limit),
        cost_estimate=cost,
    )(xf)

    # (S, NC_pad) -> (N, C, h_out, w_out)
    out = out_flat[:, :nc]
    out = jnp.transpose(out, (1, 0)).reshape(n, c, h_out, w_out)
    return out


def _ref_maxpool(x, k):
    """Pure-JAX reference: MaxPool2d(k, stride=k, padding=0, ceil_mode=True)."""
    n, c, h, w = x.shape
    s = k
    h_out = math.ceil((h - k) / s) + 1
    w_out = math.ceil((w - k) / s) + 1
    if (h_out - 1) * s >= h:
        h_out -= 1
    if (w_out - 1) * s >= w:
        w_out -= 1
    pad_h = (h_out - 1) * s + k - h
    pad_w = (w_out - 1) * s + k - w
    return jax.lax.reduce_window(
        x, -jnp.inf, jax.lax.max,
        window_dimensions=(1, 1, k, k),
        window_strides=(1, 1, s, s),
        padding=((0, 0), (0, 0), (0, pad_h), (0, pad_w)))


if __name__ == "__main__":
    key = jax.random.PRNGKey(0)
    k1, k2, k3 = jax.random.split(key, 3)

    # Case 1: mirrors the module (`input = torch.reshape(input, (-1, 1, 5, 5))`).
    x1 = jax.random.normal(k1, (4 * 1 * 5 * 5,), dtype=jnp.float32).reshape(-1, 1, 5, 5)
    y1 = jax.block_until_ready(maxpool2d_ceil(x1, kernel_size=3))
    assert y1.shape == (4, 1, 2, 2), y1.shape
    assert jnp.allclose(y1, _ref_maxpool(x1, 3)), "mismatch vs reference (5x5 case)"

    # Case 2: exercises the >=2-block channel split (nc_pad=768 -> two 384 blocks).
    x2 = jax.random.normal(k2, (2, 320, 7, 7), dtype=jnp.float32)
    y2 = jax.block_until_ready(maxpool2d_ceil(x2, kernel_size=3))
    assert y2.shape == (2, 320, 3, 3), y2.shape
    assert jnp.allclose(y2, _ref_maxpool(x2, 3)), "mismatch vs reference (channel-split case)"

    # Case 3: forces a small per-block budget to exercise the tiled 2-D grid path.
    x3 = jax.random.normal(k3, (1, 256, 48, 48), dtype=jnp.float32)
    y3 = jax.block_until_ready(maxpool2d_ceil(x3, kernel_size=3,
                                              max_in_block_bytes=64 * 1024))
    assert y3.shape == (1, 256, 16, 16), y3.shape
    assert jnp.allclose(y3, _ref_maxpool(x3, 3)), "mismatch vs reference (tiled case)"

    print("KERNEL_OK")
</pallas_src>

<mosaic_0001>
module attributes {stable_mosaic.version = 11 : i64} {
  func.func @_maxpool_kernel(%arg0: i32, %arg1: i32, %arg2: memref<9x4x128xf32, #tpu.memory_space<vmem>>, %arg3: memref<4x128xf32, #tpu.memory_space<vmem>>) attributes {dimension_semantics = [#tpu.dimension_semantics<parallel>, #tpu.dimension_semantics<parallel>], iteration_bounds = array<i64: 1, 1>, scalar_prefetch = 0 : i64, scratch_operands = 0 : i64, tpu.core_type = #tpu.core_type<tc>, window_params = [{transform_indices = @transform_0, window_bounds = array<i64: 9, 4, 128>}, {transform_indices = @transform_1, window_bounds = array<i64: 4, 128>}]} {
    %c0 = arith.constant 0 : index
    %c0_0 = arith.constant 0 : index
    %c0_1 = arith.constant 0 : index
    %0 = vector.load %arg2[%c0, %c0_0, %c0_1] : memref<9x4x128xf32, #tpu.memory_space<vmem>>, vector<1x4x128xf32>
    %1 = vector.shape_cast %0 : vector<1x4x128xf32> to vector<4x128xf32>
    %c1 = arith.constant 1 : index
    %c0_2 = arith.constant 0 : index
    %c0_3 = arith.constant 0 : index
    %2 = vector.load %arg2[%c1, %c0_2, %c0_3] : memref<9x4x128xf32, #tpu.memory_space<vmem>>, vector<1x4x128xf32>
    %3 = vector.shape_cast %2 : vector<1x4x128xf32> to vector<4x128xf32>
    %c2 = arith.constant 2 : index
    %c0_4 = arith.constant 0 : index
    %c0_5 = arith.constant 0 : index
    %4 = vector.load %arg2[%c2, %c0_4, %c0_5] : memref<9x4x128xf32, #tpu.memory_space<vmem>>, vector<1x4x128xf32>
    %5 = vector.shape_cast %4 : vector<1x4x128xf32> to vector<4x128xf32>
    %c3 = arith.constant 3 : index
    %c0_6 = arith.constant 0 : index
    %c0_7 = arith.constant 0 : index
    %6 = vector.load %arg2[%c3, %c0_6, %c0_7] : memref<9x4x128xf32, #tpu.memory_space<vmem>>, vector<1x4x128xf32>
    %7 = vector.shape_cast %6 : vector<1x4x128xf32> to vector<4x128xf32>
    %c4 = arith.constant 4 : index
    %c0_8 = arith.constant 0 : index
    %c0_9 = arith.constant 0 : index
    %8 = vector.load %arg2[%c4, %c0_8, %c0_9] : memref<9x4x128xf32, #tpu.memory_space<vmem>>, vector<1x4x128xf32>
    %9 = vector.shape_cast %8 : vector<1x4x128xf32> to vector<4x128xf32>
    %c5 = arith.constant 5 : index
    %c0_10 = arith.constant 0 : index
    %c0_11 = arith.constant 0 : index
    %10 = vector.load %arg2[%c5, %c0_10, %c0_11] : memref<9x4x128xf32, #tpu.memory_space<vmem>>, vector<1x4x128xf32>
    %11 = vector.shape_cast %10 : vector<1x4x128xf32> to vector<4x128xf32>
    %c6 = arith.constant 6 : index
    %c0_12 = arith.constant 0 : index
    %c0_13 = arith.constant 0 : index
    %12 = vector.load %arg2[%c6, %c0_12, %c0_13] : memref<9x4x128xf32, #tpu.memory_space<vmem>>, vector<1x4x128xf32>
    %13 = vector.shape_cast %12 : vector<1x4x128xf32> to vector<4x128xf32>
    %c7 = arith.constant 7 : index
    %c0_14 = arith.constant 0 : index
    %c0_15 = arith.constant 0 : index
    %14 = vector.load %arg2[%c7, %c0_14, %c0_15] : memref<9x4x128xf32, #tpu.memory_space<vmem>>, vector<1x4x128xf32>
    %15 = vector.shape_cast %14 : vector<1x4x128xf32> to vector<4x128xf32>
    %c8 = arith.constant 8 : index
    %c0_16 = arith.constant 0 : index
    %c0_17 = arith.constant 0 : index
    %16 = vector.load %arg2[%c8, %c0_16, %c0_17] : memref<9x4x128xf32, #tpu.memory_space<vmem>>, vector<1x4x128xf32>
    %17 = vector.shape_cast %16 : vector<1x4x128xf32> to vector<4x128xf32>
    %18 = arith.maximumf %1, %3 : vector<4x128xf32>
    %19 = arith.maximumf %5, %7 : vector<4x128xf32>
    %20 = arith.maximumf %9, %11 : vector<4x128xf32>
    %21 = arith.maximumf %13, %15 : vector<4x128xf32>
    %22 = arith.maximumf %18, %19 : vector<4x128xf32>
    %23 = arith.maximumf %20, %21 : vector<4x128xf32>
    %24 = arith.maximumf %22, %23 : vector<4x128xf32>
    %25 = arith.maximumf %24, %17 : vector<4x128xf32>
    %c0_18 = arith.constant 0 : index
    %c0_19 = arith.constant 0 : index
    %26 = vector.load %arg3[%c0_18, %c0_19] : memref<4x128xf32, #tpu.memory_space<vmem>>, vector<4x128xf32>
    tpu.vector_store %arg3[%c0_18, %c0_19], %25 {strides = array<i32>} : memref<4x128xf32, #tpu.memory_space<vmem>>, vector<4x128xf32>,
    return
  }
  func.func @transform_0(%arg0: i32, %arg1: i32) -> (i32, i32, i32) {
    %c0_i32 = arith.constant 0 : i32
    %c0_i32_0 = arith.constant 0 : i32
    return %c0_i32, %arg0, %arg1 : i32, i32, i32
  }
  func.func @transform_1(%arg0: i32, %arg1: i32) -> (i32, i32) {
    %c0_i32 = arith.constant 0 : i32
    return %arg0, %arg1 : i32, i32
  }
}

</mosaic_0001>

<llo_original>
// kernel: maxpool2d_ceil.1
$region0: #{maxpool2d_ceil.1}
  #allocation0 [shape = 'u32[]', space=smem, size = 0x4, offset = 0x4, fixed_abs, tag = 'smem constant byte address 0x4 - core index']
  #allocation1 [shape = 'u32[72,128]{1,0:T(1,128)}', space=vmem, size = 0x9000, scoped, tag = 'internal scratch']
  %s0 = inlined_call_operand.vmem [shape: f32[9,4,128], index: 0, kind: input, shape index: {}]
  %s1 = inlined_call_operand.hbm [shape: f32[4,128], index: 1, kind: output, shape index: {}]
  %s2 = sld [smem:[#allocation0]]
  $region14: #{maxpool2d_ceil.1} parent=0
    _
  %s4 = ssub.s32 1, %s2
  %s5 = scalar_select 0, %s4, %s2
  $region1: #{maxpool2d_ceil.1} parent=0
    #allocation2 [shape = 'u8[2048]{0}', space=vmem, size = 0x800, scoped, tag = 'output window, operand 0, single buffered']
    #allocation3 [shape = 's32[1]{0}', space=sflag, size = 0x4, scoped, tag = 'scoped memory for maxpool2d_ceil.1']
    %6 = vsyncpa [#allocation3], 0
    // Predicated region
    $region2: #{maxpool2d_ceil.1} parent=1 // pred_check
      _
    $region3: #{maxpool2d_ceil.1} parent=1 // pred_check_branch
      %8 = sbr.rel (0) target = $region5
    $region4: #{maxpool2d_ceil.1} parent=1 // pred_region
      _
    $region5: #{maxpool2d_ceil.1} parent=1 // pred_fallthru
      _
    %v9 = vld [vmem:[%s0] sm:$0xf]
    %s10 = scalar_lea.vmem %s0, 4
    %v11 = vld [vmem:[%s10] sm:$0xf]
    %s12 = scalar_lea.vmem %s0, 8
    %v13 = vld [vmem:[%s12] sm:$0xf]
    %s14 = scalar_lea.vmem %s0, 12
    %v15 = vld [vmem:[%s14] sm:$0xf]
    %s16 = scalar_lea.vmem %s0, 16
    %v17 = vld [vmem:[%s16] sm:$0xf]
    %s18 = scalar_lea.vmem %s0, 20
    %v19 = vld [vmem:[%s18] sm:$0xf]
    %s20 = scalar_lea.vmem %s0, 24
    %v21 = vld [vmem:[%s20] sm:$0xf]
    %s22 = scalar_lea.vmem %s0, 28
    %v23 = vld [vmem:[%s22] sm:$0xf]
    %s24 = scalar_lea.vmem %s0, 32
    %v25 = vld [vmem:[%s24] sm:$0xf]
    %v26 = vmax.f32 %v9, %v11
    %v27 = vmax.f32 %v13, %v15
    %v28 = vmax.f32 %v17, %v19
    %v29 = vmax.f32 %v21, %v23
    %v30 = vmax.f32 %v26, %v27
    %v31 = vmax.f32 %v28, %v29
    %v32 = vmax.f32 %v30, %v31
    %v33 = vmax.f32 %v32, %v25
    %34 = vst [vmem:[#allocation2] sm:$0xf] %v33
    // Predicated region
    $region6: #{maxpool2d_ceil.1} parent=1 // pred_check
      _
    $region7: #{maxpool2d_ceil.1} parent=1 // pred_check_branch
      %36 = sbr.rel (0) target = $region9
    $region8: #{maxpool2d_ceil.1} parent=1 // pred_region
      %38 = vsyncadd [#allocation3], 0
      %s40 = sshll.u32 [#allocation2], 4
      %s41 = int_to_ptr.vmem [resolvable:$true] %s40
      %s42 = sshll.u32 %s1, 4
      %s43 = int_to_ptr.hbm [resolvable:$true] %s42
      %45 = dma.vmem_to_hbm [thread:$0]  %s41, 64, %s43, [#allocation3]
    $region9: #{maxpool2d_ceil.1} parent=1 // pred_fallthru
      _
    // Predicated region
    $region10: #{maxpool2d_ceil.1} parent=1 // pred_check
      _
    $region11: #{maxpool2d_ceil.1} parent=1 // pred_check_branch
      %47 = sbr.rel (0) target = $region13
    $region12: #{maxpool2d_ceil.1} parent=1 // pred_region
      %49 = dma.done [#allocation3], 64
    $region13: #{maxpool2d_ceil.1} parent=1 // pred_fallthru
      _
    %50 = vsyncpa [#allocation3], 1

</llo_original>
